<compile_context>
chip_gen: v5e
topology: v5e:2x2
jax: 0.10.0
libtpu: 0.0.40
codegen_flags: <defaults>
</compile_context>

<pallas_src>
import jax
import jax.numpy as jnp
from jax import lax
from jax.experimental import pallas as pl
from jax.experimental.pallas import tpu as pltpu


_MIB = 1024 * 1024
_FAST_PATH_BYTES = 8 * _MIB      # whole problem in one block below this


# ---------------------------------------------------------------------------
# Small helpers
# ---------------------------------------------------------------------------

def _cdiv(a: int, b: int) -> int:
    return -(-a // b)


def _round_up(x: int, m: int) -> int:
    return _cdiv(x, m) * m


def _sublane_pack(dtype) -> int:
    """Rows of this dtype packed into one 32-bit sublane group (8/16/32)."""
    itemsize = jnp.dtype(dtype).itemsize
    return max(8, 32 // max(1, itemsize))


def _max_identity(dtype):
    """Identity element of `max` (used only to mask ragged-S rows)."""
    dtype = jnp.dtype(dtype)
    if dtype == jnp.bool_:
        return False
    if jnp.issubdtype(dtype, jnp.floating):
        return float("-inf")
    if jnp.issubdtype(dtype, jnp.integer):
        return int(jnp.iinfo(dtype).min)
    raise ValueError(f"unsupported dtype for max pooling: {dtype}")


def _tpu_info():
    try:
        return pltpu.get_tpu_info()
    except Exception:
        return None


def _vmem_cap_bytes():
    info = _tpu_info()
    if info is None:
        return None
    cap = getattr(info, "vmem_capacity_bytes", None)
    try:
        cap = int(cap)
    except (TypeError, ValueError):
        return None
    return cap if cap > 0 else None


def _vmem_limit_bytes() -> int:
    cap = _vmem_cap_bytes()
    if cap is None:
        return 48 * _MIB                 # safe on every generation (v7x: 64 MiB/TC)
    if cap >= 96 * _MIB:                 # v5e / v6e: 128 MiB physical
        return 64 * _MIB
    return min(48 * _MIB, (cap * 3) // 4)  # v7x-style 64 MiB parts


def _target_block_bytes() -> int:
    cap = _vmem_cap_bytes()
    if cap is not None and cap >= 96 * _MIB:
        return 16 * _MIB                 # plenty of VMEM: amortize per-step cost
    return 8 * _MIB                      # v7x (64 MiB VMEM) / unknown


def _num_tensorcores() -> int:
    info = _tpu_info()
    if info is not None:
        for name in ("num_tensorcores", "tensorcore_count", "num_cores",
                     "core_count"):
            n = getattr(info, name, None)
            try:
                n = int(n)
            except (TypeError, ValueError):
                continue
            if n > 0:
                return n
    return 1                             # conservative: don't split F needlessly


def _choose_tile_f(F: int, n_cores: int) -> int:
    """Lane-dense F tile; split only when a megacore can use the parallelism."""
    if F % 128 != 0:
        return F                         # full extent (allowed by BlockSpec rules)
    if n_cores >= 2 and F >= 256:
        for cand in (512, 256, 128):
            if F % cand == 0 and F // cand >= n_cores:
                return cand
        return F
    # Single TensorCore: keep F whole for long contiguous DMA rows unless huge.
    if F >= 2048:
        for cand in (1024, 512):
            if F % cand == 0:
                return cand
    return F


# ---------------------------------------------------------------------------
# Kernels
# ---------------------------------------------------------------------------

def _maxpool_small_kernel(x_ref, o_ref):
    # Whole (B, S, F) array resident in VMEM: one reduce, no pipeline.
    o_ref[...] = jnp.max(x_ref[...], axis=1).astype(o_ref.dtype)


def _make_tiled_kernel(*, sub, tile_s, tile_f, n_groups, valid_rows_last,
                       identity, n_carries, use_ref_acc, unroll):
    """Build the tiled kernel. Grid = (F tiles [parallel], S tiles [arbitrary])."""
    needs_mask = valid_rows_last < tile_s

    def kernel(x_ref, o_ref, acc_ref):
        s = pl.program_id(1)
        is_last = s == pl.num_programs(1) - 1

        if needs_mask:
            # Sublane-row index within one group; hoisted out of the loops.
            row_in_group = lax.broadcasted_iota(jnp.int32, (sub, tile_f), 0)[None]
            ident_v = jnp.asarray(identity, dtype=x_ref.dtype)

        def load_group(g):
            if isinstance(g, int):
                v = x_ref[:, g * sub:(g + 1) * sub, :]
            else:
                start = pl.multiple_of(g * sub, sub)
                v = x_ref[:, pl.ds(start, sub), :]
            if needs_mask:
                # Only rows of the last S tile beyond `valid_rows_last` are
                # out of bounds (DMA leaves them unspecified) -> mask them
                # with the max identity BEFORE any maxima.
                rows = row_in_group + g * sub
                keep = jnp.logical_or(jnp.logical_not(is_last),
                                      rows < valid_rows_last)
                v = jnp.where(keep, v, ident_v)
            return v

        if use_ref_acc:
            # Large (B, sub, tile_f): keep the running max in VMEM scratch so
            # the loop carry never exceeds the vreg file.
            first = load_group(0)

            @pl.when(s == 0)
            def _():
                acc_ref[...] = first

            @pl.when(s > 0)
            def _():
                acc_ref[...] = jnp.maximum(acc_ref[...], first)

            if n_groups > 1:
                def body(g, carry):
                    acc_ref[...] = jnp.maximum(acc_ref[...], load_group(g))
                    return carry
                lax.fori_loop(1, n_groups, body, 0, unroll=unroll)
        else:
            # Reduce this tile down to one (B, sub, tile_f) sublane group with
            # element-wise maxima only (VPU); the cross-sublane XLU reduce is
            # deferred to the final S step.
            if n_carries == 2 and n_groups >= 2:
                # Two independent accumulators break the serial vmax chain so
                # loads / maxima can co-issue.
                n_pairs = n_groups // 2
                acc0 = load_group(0)
                acc1 = load_group(1)
                if n_pairs > 1:
                    def body(p, carry):
                        a0, a1 = carry
                        g = p * 2
                        a0 = jnp.maximum(a0, load_group(g))
                        a1 = jnp.maximum(a1, load_group(g + 1))
                        return a0, a1
                    acc0, acc1 = lax.fori_loop(1, n_pairs, body, (acc0, acc1),
                                               unroll=unroll)
                if n_groups % 2:
                    acc0 = jnp.maximum(acc0, load_group(n_groups - 1))
                partial = jnp.maximum(acc0, acc1)
            else:
                partial = load_group(0)
                if n_groups > 1:
                    def body(g, acc):
                        return jnp.maximum(acc, load_group(g))
                    partial = lax.fori_loop(1, n_groups, body, partial,
                                            unroll=unroll)

            # Running maximum; first S step writes directly (no -inf identity
            # needed, so integer/bool dtypes stay correct).
            @pl.when(s == 0)
            def _():
                acc_ref[...] = partial

            @pl.when(s > 0)
            def _():
                acc_ref[...] = jnp.maximum(acc_ref[...], partial)

        # Single cross-sublane reduce, only when the output block is written.
        @pl.when(is_last)
        def _():
            o_ref[...] = jnp.max(acc_ref[...], axis=1).astype(o_ref.dtype)

    return kernel


# ---------------------------------------------------------------------------
# Wrappers
# ---------------------------------------------------------------------------

def _fast_max_pool(x):
    B, S, F = x.shape
    dtype = x.dtype
    itemsize = jnp.dtype(dtype).itemsize
    cost = pl.CostEstimate(flops=B * S * F, transcendentals=0,
                           bytes_accessed=B * S * F * itemsize + B * F * itemsize)
    return pl.pallas_call(
        _maxpool_small_kernel,
        out_shape=jax.ShapeDtypeStruct((B, F), dtype),
        grid_spec=pltpu.PrefetchScalarGridSpec(
            num_scalar_prefetch=0,
            grid=(1,),
            in_specs=[pl.BlockSpec((B, S, F), lambda i: (0, 0, 0))],
            out_specs=pl.BlockSpec((B, F), lambda i: (0, 0)),
        ),
        compiler_params=pltpu.CompilerParams(
            dimension_semantics=("arbitrary",),
            vmem_limit_bytes=_vmem_limit_bytes(),
        ),
        cost_estimate=cost,
    )(x)


def _tiled_max_pool(x):
    B, S, F = x.shape
    dtype = x.dtype
    itemsize = jnp.dtype(dtype).itemsize
    sub = _sublane_pack(dtype)

    n_cores = _num_tensorcores()
    tile_f = _choose_tile_f(F, n_cores)
    n_f = F // tile_f

    # Largest sub-aligned S tile whose input block stays under the budget,
    # rebalanced so tiles are near-equal; the final cdiv guarantees only the
    # LAST tile can be partial (which is the only tile the kernel masks).
    target = _target_block_bytes()
    bytes_per_row = max(1, B * tile_f * itemsize)
    rows_budget = max(sub, (target // bytes_per_row) // sub * sub)
    tile_s = min(rows_budget, _round_up(S, sub))
    n_s = _cdiv(S, tile_s)
    tile_s = _round_up(_cdiv(S, n_s), sub)
    n_s = _cdiv(S, tile_s)
    valid_rows_last = S - (n_s - 1) * tile_s
    assert 0 < valid_rows_last <= tile_s
    n_groups = tile_s // sub

    # Loop-carry sizing: two independent accumulators when they comfortably
    # fit the 64-vreg file, otherwise one, otherwise accumulate straight into
    # the VMEM scratch (bounds spill pressure for large B).
    elems_per_vreg = 1024 * max(1, 4 // itemsize)
    carry_vregs = _cdiv(B * sub * tile_f, elems_per_vreg)
    if 2 * carry_vregs <= 16:
        n_carries, use_ref_acc = 2, False
    elif carry_vregs <= 24:
        n_carries, use_ref_acc = 1, False
    else:
        n_carries, use_ref_acc = 1, True

    unroll = max(1, min(4 if n_carries == 2 else 8, n_groups))

    kernel = _make_tiled_kernel(
        sub=sub, tile_s=tile_s, tile_f=tile_f, n_groups=n_groups,
        valid_rows_last=valid_rows_last, identity=_max_identity(dtype),
        n_carries=n_carries, use_ref_acc=use_ref_acc, unroll=unroll)

    cost = pl.CostEstimate(flops=B * S * F, transcendentals=0,
                           bytes_accessed=B * S * F * itemsize + B * F * itemsize)

    return pl.pallas_call(
        kernel,
        out_shape=jax.ShapeDtypeStruct((B, F), dtype),
        grid_spec=pltpu.PrefetchScalarGridSpec(
            num_scalar_prefetch=0,
            grid=(n_f, n_s),
            in_specs=[pl.BlockSpec((B, tile_s, tile_f), lambda f, s: (0, s, f))],
            out_specs=pl.BlockSpec((B, tile_f), lambda f, s: (0, f)),
            scratch_shapes=[pltpu.VMEM((B, sub, tile_f), dtype)],
        ),
        compiler_params=pltpu.CompilerParams(
            dimension_semantics=("parallel", "arbitrary"),
            vmem_limit_bytes=_vmem_limit_bytes(),
        ),
        cost_estimate=cost,
    )(x)


def max_pooling(x):
    """Pallas-TPU equivalent of torch.max(x, dim=1)[0] for x of shape (B, S, F)."""
    if x.ndim != 3:
        raise ValueError(f"expected a (B, S, F) input, got shape {x.shape}")
    B, S, F = x.shape
    if S == 0:
        raise ValueError("cannot max-pool over an empty set axis")
    itemsize = jnp.dtype(x.dtype).itemsize
    total_bytes = B * S * F * itemsize

    # Fast path: whole problem comfortably fits one VMEM block.
    if total_bytes <= _FAST_PATH_BYTES:
        return _fast_max_pool(x)

    # Narrow-feature lane folding: (B, S, F) -> (B, S//k, k*F), k = 128//F.
    # Pure row-major reshape (free), makes the last dim lane-dense; finish
    # with a tiny (B, k, F) max in the wrapper.
    if F < 128 and 128 % F == 0:
        k = 128 // F
        if k > 1 and S % k == 0:
            folded = x.reshape(B, S // k, k * F)
            out = _tiled_max_pool(folded)              # (B, k*F)
            return jnp.max(out.reshape(B, k, F), axis=1)

    return _tiled_max_pool(x)


# ---------------------------------------------------------------------------
# Demo / self-test
# ---------------------------------------------------------------------------

if __name__ == "__main__":
    key = jax.random.PRNGKey(0)
    k_small, k_big = jax.random.split(key)

    # Small deepsets-style shape (batch=2, set=16, hidden=32) -> fast path.
    x_small = jax.random.normal(k_small, (2, 16, 32), dtype=jnp.float32)
    out_small = jax.block_until_ready(max_pooling(x_small))
    ref_small = jnp.max(x_small, axis=1)
    assert out_small.shape == ref_small.shape == (2, 32)
    assert jnp.allclose(out_small, ref_small), "fast-path mismatch vs reference"

    # Larger set to exercise the tiled path (multi-step S accumulation,
    # in-kernel ragged-S masking, dual-accumulator VPU reduce loop).
    x_big = jax.random.normal(k_big, (2, 5001, 256), dtype=jnp.float32)
    out_big = jax.block_until_ready(max_pooling(x_big))
    ref_big = jnp.max(x_big, axis=1)
    assert out_big.shape == ref_big.shape == (2, 256)
    assert jnp.allclose(out_big, ref_big), "tiled-path mismatch vs reference"

    print("KERNEL_OK")
</pallas_src>

<mosaic_0001>
module attributes {stable_mosaic.version = 11 : i64} {
  func.func @_maxpool_small_kernel(%arg0: i32, %arg1: memref<2x16x32xf32, #tpu.memory_space<vmem>>, %arg2: memref<2x32xf32, #tpu.memory_space<vmem>>) attributes {dimension_semantics = [#tpu.dimension_semantics<arbitrary>], iteration_bounds = array<i64: 1>, scalar_prefetch = 0 : i64, scratch_operands = 0 : i64, tpu.core_type = #tpu.core_type<tc>, window_params = [{pipeline_mode = #tpu.pipeline_mode<synchronous>, transform_indices = @transform_0, window_bounds = array<i64: 2, 16, 32>}, {pipeline_mode = #tpu.pipeline_mode<synchronous>, transform_indices = @transform_1, window_bounds = array<i64: 2, 32>}]} {
    %c0 = arith.constant 0 : index
    %c0_0 = arith.constant 0 : index
    %c0_1 = arith.constant 0 : index
    %0 = vector.load %arg1[%c0, %c0_0, %c0_1] : memref<2x16x32xf32, #tpu.memory_space<vmem>>, vector<2x16x32xf32>
    %cst = arith.constant dense<0xFF800000> : vector<2x32xf32>
    %1 = vector.multi_reduction <maximumf>, %0, %cst [1] : vector<2x16x32xf32> to vector<2x32xf32>
    %c0_2 = arith.constant 0 : index
    %c0_3 = arith.constant 0 : index
    %2 = vector.load %arg2[%c0_2, %c0_3] : memref<2x32xf32, #tpu.memory_space<vmem>>, vector<2x32xf32>
    tpu.vector_store %arg2[%c0_2, %c0_3], %1 {strides = array<i32>} : memref<2x32xf32, #tpu.memory_space<vmem>>, vector<2x32xf32>,
    return
  }
  func.func @transform_0(%arg0: i32) -> (i32, i32, i32) {
    %c0_i32 = arith.constant 0 : i32
    %c0_i32_0 = arith.constant 0 : i32
    %c0_i32_1 = arith.constant 0 : i32
    %c0_i32_2 = arith.constant 0 : i32
    return %c0_i32, %c0_i32_0, %c0_i32_1 : i32, i32, i32
  }
  func.func @transform_1(%arg0: i32) -> (i32, i32) {
    %c0_i32 = arith.constant 0 : i32
    %c0_i32_0 = arith.constant 0 : i32
    %c0_i32_1 = arith.constant 0 : i32
    return %c0_i32, %c0_i32_0 : i32, i32
  }
}

</mosaic_0001>

<llo_original>
// kernel: tpu_custom_call.1
$region0: #{tpu_custom_call.1}
  #allocation0 [shape = 'u32[]', space=smem, size = 0x4, offset = 0x4, fixed_abs, tag = 'smem constant byte address 0x4 - core index']
  #allocation1 [shape = 'u32[72,128]{1,0:T(1,128)}', space=vmem, size = 0x9000, scoped, tag = 'internal scratch']
  %s0 = inlined_call_operand.hbm [shape: f32[2,16,32], index: 0, kind: input, shape index: {}]
  %s1 = inlined_call_operand.hbm [shape: f32[2,32], index: 1, kind: output, shape index: {}]
  %s2 = sld [smem:[#allocation0]]
  $region18: #{tpu_custom_call.1} parent=0
    _
  %s4 = ssub.s32 1, %s2
  %s5 = scalar_select 0, %s4, %s2
  $region1: #{tpu_custom_call.1} parent=0
    #allocation2 [shape = 'u8[16384]{0}', space=vmem, size = 0x4000, scoped, tag = 'input window, operand 0, single buffered']
    #allocation3 [shape = 's32[1]{0}', space=sflag, size = 0x4, scoped, tag = 'scoped memory for tpu_custom_call.1']
    #allocation4 [shape = 's32[1]{0}', space=sflag, size = 0x4, scoped, tag = 'scoped memory for tpu_custom_call.1']
    #allocation5 [shape = 'u8[1024]{0}', space=vmem, size = 0x400, scoped, tag = 'output window, operand 0, single buffered']
    %6 = vsyncpa [#allocation3], 0
    %7 = vsyncpa [#allocation4], 0
    // Predicated region
    $region2: #{tpu_custom_call.1} parent=1 // pred_check
      _
    $region3: #{tpu_custom_call.1} parent=1 // pred_check_branch
      %9 = sbr.rel (0) target = $region5
    $region4: #{tpu_custom_call.1} parent=1 // pred_region
      %11 = vsyncadd [#allocation3], 0
      %s12 = sshll.u32 %s0, 4
      %s13 = int_to_ptr.hbm [resolvable:$true] %s12
      %s14 = sshll.u32 [#allocation2], 4
      %s15 = int_to_ptr.vmem [resolvable:$true] %s14
      %20 = dma.hbm_to_vmem [thread:$0]  %s13, 512, %s15, [#allocation3], 128, 128, 8
    $region5: #{tpu_custom_call.1} parent=1 // pred_fallthru
      _
    // Predicated region
    $region6: #{tpu_custom_call.1} parent=1 // pred_check
      _
    $region7: #{tpu_custom_call.1} parent=1 // pred_check_branch
      %22 = sbr.rel (0) target = $region9
    $region8: #{tpu_custom_call.1} parent=1 // pred_region
      %24 = dma.done [#allocation3], 512
    $region9: #{tpu_custom_call.1} parent=1 // pred_fallthru
      _
    %v25 = vld [vmem:[#allocation2] sm:$0xff]
    %v26 = vld [vmem:[#allocation2 + $0x8] sm:$0xff]
    %v27 = vld [vmem:[#allocation2 + $0x10] sm:$0xff]
    %v28 = vld [vmem:[#allocation2 + $0x18] sm:$0xff]
    %vm29 = vcmask 261120
    %v30 = vsel %vm29, %v25, -inf
    %v31 = vsel %vm29, %v26, -inf
    %v32 = vmax.f32 %v30, %v31
    %v33 = vrot.slane %v32, 4
    %v34 = vmax.f32 %v32, %v33
    %v35 = vrot.slane %v34, 2
    %v36 = vmax.f32 %v34, %v35
    %v37 = vrot.slane %v36, 1
    %v38 = vmax.f32 %v36, %v37
    %v39 = vsel %vm29, %v27, -inf
    %v40 = vsel %vm29, %v28, -inf
    %v41 = vmax.f32 %v39, %v40
    %v42 = vrot.slane %v41, 4
    %v43 = vmax.f32 %v41, %v42
    %v44 = vrot.slane %v43, 2
    %v45 = vmax.f32 %v43, %v44
    %v46 = vrot.slane %v45, 1
    %v47 = vmax.f32 %v45, %v46
    %vm50 = vcmask 1041409
    %v51 = vsel %vm50, %v47, %v38
    %vm53 = vcmask 254976
    %54 = vst.msk [vmem:[#allocation5] sm:$0x3] %vm53, %v51
    // Predicated region
    $region10: #{tpu_custom_call.1} parent=1 // pred_check
      _
    $region11: #{tpu_custom_call.1} parent=1 // pred_check_branch
      %56 = sbr.rel (0) target = $region13
    $region12: #{tpu_custom_call.1} parent=1 // pred_region
      %58 = vsyncadd [#allocation4], 0
      %s60 = sshll.u32 [#allocation5], 4
      %s61 = int_to_ptr.vmem [resolvable:$true] %s60
      %s62 = sshll.u32 %s1, 4
      %s63 = int_to_ptr.hbm [resolvable:$true] %s62
      %65 = dma.vmem_to_hbm [thread:$0]  %s61, 32, %s63, [#allocation4]
    $region13: #{tpu_custom_call.1} parent=1 // pred_fallthru
      _
    // Predicated region
    $region14: #{tpu_custom_call.1} parent=1 // pred_check
      _
    $region15: #{tpu_custom_call.1} parent=1 // pred_check_branch
      %67 = sbr.rel (0) target = $region17
    $region16: #{tpu_custom_call.1} parent=1 // pred_region
      %69 = dma.done [#allocation4], 32
    $region17: #{tpu_custom_call.1} parent=1 // pred_fallthru
      _
    %70 = vsyncpa [#allocation3], 1
    %71 = vsyncpa [#allocation4], 1

</llo_original>
